<compile_context>
chip_gen: v5e
topology: v5e:2x2
jax: 0.10.0
libtpu: 0.0.40
codegen_flags: <defaults>
</compile_context>

<pallas_src>
import jax
import jax.numpy as jnp
from jax.experimental import pallas as pl
from jax.experimental.pallas import tpu as pltpu

HIDDEN = 768   # DeBERTa-base hidden size
FC1 = 512
FC2 = 512
TM_DEFAULT = 1024   # rows per tile; 2 x (1024*768*4B) double-buffered ~ 6 MiB VMEM


def _round_up(x, m):
    return (x + m - 1) // m * m


def head_kernel(x_ref, w_ref, b_ref, o_ref):
    """Folded fc1->fc2->fc3 head: per-row dot with the folded [768] weight.

    x_ref : [TM, 768]  activation tile (hidden on lanes)
    w_ref : [1, 768]   folded weight row (w1 @ w2 @ w3, transposed)
    b_ref : [1, 1]     folded bias
    o_ref : [TM, 1]    logits
    """
    x = x_ref[...]                                   # [TM, 768] f32
    w = w_ref[...]                                   # [1, 768]  f32 (VMEM-resident)
    # dropout (p=config['dropout']) is identity in eval/inference mode
    acc = jnp.sum(x * w, axis=-1, keepdims=True)     # VPU mul + XLU lane reduce
    o_ref[...] = (acc + b_ref[...]).astype(o_ref.dtype)


def fold_head_params(w1, b1, w2, b2, w3, b3):
    """Fold fc1/fc2/fc3 (linear, eval-mode dropout) into one matvec. Exact in exact
    arithmetic; within f32 rounding of the sequential form."""
    w_fold = (w1 @ w2) @ w3                          # [768, 1]
    b_fold = (b1 @ w2 + b2) @ w3 + b3                # [1, 1]
    return w_fold.reshape(1, HIDDEN), b_fold.reshape(1, 1)


def regression_head(x_flat, w_fold, b_fold, *, tm=TM_DEFAULT):
    """x_flat: [M, 768] -> [M, 1] with an M-tiled, pipelined Pallas call."""
    M = x_flat.shape[0]
    TM = min(tm, _round_up(M, 8))                    # sublane-aligned tile
    M_pad = _round_up(M, TM)
    if M_pad != M:
        x_flat = jnp.pad(x_flat, ((0, M_pad - M), (0, 0)))
    grid = (M_pad // TM,)

    cost = pl.CostEstimate(
        flops=2 * M_pad * HIDDEN,
        transcendentals=0,
        bytes_accessed=M_pad * HIDDEN * 4 + M_pad * 4 + (HIDDEN + 1) * 4,
    )

    out = pl.pallas_call(
        head_kernel,
        out_shape=jax.ShapeDtypeStruct((M_pad, 1), jnp.float32),
        grid=grid,
        in_specs=[
            pl.BlockSpec((TM, HIDDEN), lambda i: (i, 0)),   # streamed activation tile
            pl.BlockSpec((1, HIDDEN), lambda i: (0, 0)),    # folded weight (resident)
            pl.BlockSpec((1, 1), lambda i: (0, 0)),         # folded bias (resident)
        ],
        out_specs=pl.BlockSpec((TM, 1), lambda i: (i, 0)),
        compiler_params=pltpu.CompilerParams(
            dimension_semantics=("parallel",),              # shard tiles across TCs (v7x)
            vmem_limit_bytes=32 * 1024 * 1024,              # explicit budget (fits v7x)
        ),
        cost_estimate=cost,
    )(x_flat, w_fold, b_fold)
    return out[:M]


def deberta_stub(input_ids, attention_mask, emb_table):
    """Deterministic stand-in for DebertaModel(...)[0] -> [B, S, 768]."""
    hidden = jnp.take(emb_table, input_ids, axis=0)               # [B, S, 768]
    return hidden * attention_mask[..., None].astype(hidden.dtype)


def custom_model_forward(input_ids, attention_mask, params):
    B, S = input_ids.shape
    hidden = deberta_stub(input_ids, attention_mask, params["emb"])   # [B, S, 768]
    x_flat = hidden.reshape(B * S, HIDDEN)
    # Fold once per call (tiny; hoist to init for production).
    w_fold, b_fold = fold_head_params(
        params["w1"], params["b1"],
        params["w2"], params["b2"],
        params["w3"], params["b3"],
    )
    logits = regression_head(x_flat, w_fold, b_fold)                  # [B*S, 1]
    return logits.reshape(B, S)  # matches .squeeze(-1) on [B, S, 1]


def init_params(key, vocab_size):
    """Deterministic synthetic parameters (nn.Linear-style uniform init)."""
    k_emb, k1, k2, k3, kb1, kb2, kb3 = jax.random.split(key, 7)

    def linear_init(kw, kb, fan_in, fan_out):
        bound = 1.0 / jnp.sqrt(fan_in)
        w = jax.random.uniform(kw, (fan_in, fan_out), jnp.float32, -bound, bound)
        b = jax.random.uniform(kb, (1, fan_out), jnp.float32, -bound, bound)
        return w, b

    w1, b1 = linear_init(k1, kb1, HIDDEN, FC1)
    w2, b2 = linear_init(k2, kb2, FC1, FC2)
    w3, b3 = linear_init(k3, kb3, FC2, 1)
    emb = jax.random.normal(k_emb, (vocab_size, HIDDEN), jnp.float32) * 0.02
    return {"emb": emb, "w1": w1, "b1": b1, "w2": w2, "b2": b2,
            "w3": w3, "b3": b3}


def _reference_head(hidden_flat, params):
    """Unfused sequential fc1->fc2->fc3 reference (plain JAX)."""
    h1 = hidden_flat @ params["w1"] + params["b1"]
    h2 = h1 @ params["w2"] + params["b2"]
    return h2 @ params["w3"] + params["b3"]


if __name__ == "__main__":
    key = jax.random.PRNGKey(0)
    k_params, k_ids = jax.random.split(key)

    VOCAB = 128
    params = init_params(k_params, VOCAB)

    # --- small case: B=2, S=8 ---
    B, S = 2, 8
    input_ids = jax.random.randint(k_ids, (B, S), 0, VOCAB, dtype=jnp.int32)
    attention_mask = jnp.ones((B, S), dtype=jnp.int32)

    logits = jax.block_until_ready(
        custom_model_forward(input_ids, attention_mask, params))

    hidden = deberta_stub(input_ids, attention_mask, params["emb"]).reshape(B * S, HIDDEN)
    ref = _reference_head(hidden, params).reshape(B, S)
    assert logits.shape == (B, S)
    assert jnp.allclose(logits, ref, atol=2e-4, rtol=1e-3), \
        float(jnp.max(jnp.abs(logits - ref)))

    # --- larger case: exercises multi-tile grid + M padding (M=1200 -> 2 tiles) ---
    B2, S2 = 4, 300
    k_ids2, k_mask2 = jax.random.split(k_ids)
    ids2 = jax.random.randint(k_ids2, (B2, S2), 0, VOCAB, dtype=jnp.int32)
    mask2 = (jax.random.uniform(k_mask2, (B2, S2)) > 0.2).astype(jnp.int32)

    logits2 = jax.block_until_ready(custom_model_forward(ids2, mask2, params))

    hidden2 = deberta_stub(ids2, mask2, params["emb"]).reshape(B2 * S2, HIDDEN)
    ref2 = _reference_head(hidden2, params).reshape(B2, S2)
    assert logits2.shape == (B2, S2)
    assert jnp.allclose(logits2, ref2, atol=2e-4, rtol=1e-3), \
        float(jnp.max(jnp.abs(logits2 - ref2)))

    print("KERNEL_OK")
</pallas_src>

<mosaic_0001>
module attributes {stable_mosaic.version = 11 : i64} {
  func.func @head_kernel(%arg0: i32, %arg1: memref<16x768xf32, #tpu.memory_space<vmem>>, %arg2: memref<1x768xf32, #tpu.memory_space<vmem>>, %arg3: memref<1x1xf32, #tpu.memory_space<vmem>>, %arg4: memref<16x1xf32, #tpu.memory_space<vmem>>) attributes {dimension_semantics = [#tpu.dimension_semantics<parallel>], iteration_bounds = array<i64: 1>, scalar_prefetch = 0 : i64, scratch_operands = 0 : i64, tpu.core_type = #tpu.core_type<tc>, window_params = [{transform_indices = @transform_0, window_bounds = array<i64: 16, 768>}, {pipeline_mode = #tpu.pipeline_mode<synchronous>, transform_indices = @transform_1, window_bounds = array<i64: 1, 768>}, {pipeline_mode = #tpu.pipeline_mode<synchronous>, transform_indices = @transform_2, window_bounds = array<i64: 1, 1>}, {transform_indices = @transform_3, window_bounds = array<i64: 16, 1>}]} {
    %c0 = arith.constant 0 : index
    %c0_0 = arith.constant 0 : index
    %0 = vector.load %arg1[%c0, %c0_0] : memref<16x768xf32, #tpu.memory_space<vmem>>, vector<16x768xf32>
    %c0_1 = arith.constant 0 : index
    %c0_2 = arith.constant 0 : index
    %1 = vector.load %arg2[%c0_1, %c0_2] : memref<1x768xf32, #tpu.memory_space<vmem>>, vector<1x768xf32>
    %2 = vector.broadcast %1 : vector<1x768xf32> to vector<16x768xf32>
    %3 = arith.mulf %0, %2 : vector<16x768xf32>
    %cst = arith.constant dense<0.000000e+00> : vector<16xf32>
    %4 = vector.multi_reduction <add>, %3, %cst [1] : vector<16x768xf32> to vector<16xf32>
    %5 = vector.shape_cast %4 : vector<16xf32> to vector<16x1xf32>
    %c0_3 = arith.constant 0 : index
    %c0_4 = arith.constant 0 : index
    %6 = vector.load %arg3[%c0_3, %c0_4] : memref<1x1xf32, #tpu.memory_space<vmem>>, vector<1x1xf32>
    %7 = vector.broadcast %6 : vector<1x1xf32> to vector<16x1xf32>
    %8 = arith.addf %5, %7 : vector<16x1xf32>
    %c0_5 = arith.constant 0 : index
    %c0_6 = arith.constant 0 : index
    %9 = vector.load %arg4[%c0_5, %c0_6] : memref<16x1xf32, #tpu.memory_space<vmem>>, vector<16x1xf32>
    tpu.vector_store %arg4[%c0_5, %c0_6], %8 {strides = array<i32>} : memref<16x1xf32, #tpu.memory_space<vmem>>, vector<16x1xf32>,
    return
  }
  func.func @transform_0(%arg0: i32) -> (i32, i32) {
    %c0_i32 = arith.constant 0 : i32
    %c0_i32_0 = arith.constant 0 : i32
    return %arg0, %c0_i32 : i32, i32
  }
  func.func @transform_1(%arg0: i32) -> (i32, i32) {
    %c0_i32 = arith.constant 0 : i32
    %c0_i32_0 = arith.constant 0 : i32
    %c0_i32_1 = arith.constant 0 : i32
    return %c0_i32, %c0_i32_0 : i32, i32
  }
  func.func @transform_2(%arg0: i32) -> (i32, i32) {
    %c0_i32 = arith.constant 0 : i32
    %c0_i32_0 = arith.constant 0 : i32
    %c0_i32_1 = arith.constant 0 : i32
    return %c0_i32, %c0_i32_0 : i32, i32
  }
  func.func @transform_3(%arg0: i32) -> (i32, i32) {
    %c0_i32 = arith.constant 0 : i32
    %c0_i32_0 = arith.constant 0 : i32
    return %arg0, %c0_i32 : i32, i32
  }
}

</mosaic_0001>

<llo_original>
// kernel: tpu_custom_call.1
$region0: #{tpu_custom_call.1}
  #allocation0 [shape = 'u32[]', space=smem, size = 0x4, offset = 0x4, fixed_abs, tag = 'smem constant byte address 0x4 - core index']
  #allocation1 [shape = 'u32[72,128]{1,0:T(1,128)}', space=vmem, size = 0x9000, scoped, tag = 'internal scratch']
  #allocation2 [shape = 'f32[1,1]{1,0:T(1,128)S(1)}', space=vmem, size = 0x200, scoped, tag = 'scoped memory for tpu_custom_call.1']
  %s0 = inlined_call_operand.hbm [shape: f32[16,768], index: 0, kind: input, shape index: {}]
  %s1 = inlined_call_operand.hbm [shape: f32[1,768], index: 1, kind: input, shape index: {}]
  %s2 = inlined_call_operand.<no memory space> [shape: f32[1,1], index: 2, kind: input, shape index: {}]
  %s3 = inlined_call_operand.vmem [shape: f32[16,1], index: 3, kind: output, shape index: {}]
  %s4 = sld [smem:[#allocation0]]
  $region30: #{tpu_custom_call.1} parent=0
    _
  %s6 = ssub.s32 1, %s4
  %s7 = scalar_select 0, %s6, %s4
  %v8 = vstv %s2
  %9 = vst [vmem:[#allocation2] sm:$0x1] %v8
  $region1: #{tpu_custom_call.1} parent=0
    #allocation3 [shape = 'u8[49152]{0}', space=vmem, size = 0xc000, scoped, tag = 'input window, operand 0, single buffered']
    #allocation4 [shape = 's32[1]{0}', space=sflag, size = 0x4, scoped, tag = 'scoped memory for tpu_custom_call.1']
    #allocation5 [shape = 'u8[3072]{0}', space=vmem, size = 0xc00, scoped, tag = 'input window, operand 1, single buffered']
    #allocation6 [shape = 's32[1]{0}', space=sflag, size = 0x4, scoped, tag = 'scoped memory for tpu_custom_call.1']
    %10 = vsyncpa [#allocation4], 0
    %11 = vsyncpa [#allocation6], 0
    // Predicated region
    $region2: #{tpu_custom_call.1} parent=1 // pred_check
      _
    $region3: #{tpu_custom_call.1} parent=1 // pred_check_branch
      %13 = sbr.rel (0) target = $region5
    $region4: #{tpu_custom_call.1} parent=1 // pred_region
      %15 = vsyncadd [#allocation4], 0
      %s16 = sshll.u32 %s0, 4
      %s17 = int_to_ptr.hbm [resolvable:$true] %s16
      %s18 = sshll.u32 [#allocation3], 4
      %s19 = int_to_ptr.vmem [resolvable:$true] %s18
      %24 = dma.hbm_to_vmem [thread:$0]  %s17, 1536, %s19, [#allocation4], 768, 768, 48
    $region5: #{tpu_custom_call.1} parent=1 // pred_fallthru
      _
    // Predicated region
    $region6: #{tpu_custom_call.1} parent=1 // pred_check
      _
    $region7: #{tpu_custom_call.1} parent=1 // pred_check_branch
      %26 = sbr.rel (0) target = $region9
    $region8: #{tpu_custom_call.1} parent=1 // pred_region
      %28 = vsyncadd [#allocation6], 0
      %s30 = sshll.u32 %s1, 4
      %s31 = int_to_ptr.hbm [resolvable:$true] %s30
      %s32 = sshll.u32 [#allocation5], 4
      %s33 = int_to_ptr.vmem [resolvable:$true] %s32
      %35 = dma.hbm_to_vmem [thread:$0]  %s31, 96, %s33, [#allocation6]
    $region9: #{tpu_custom_call.1} parent=1 // pred_fallthru
      _
    // Predicated region
    $region10: #{tpu_custom_call.1} parent=1 // pred_check
      _
    $region11: #{tpu_custom_call.1} parent=1 // pred_check_branch
      %37 = sbr.rel (0) target = $region13
    $region12: #{tpu_custom_call.1} parent=1 // pred_region
      _
    $region13: #{tpu_custom_call.1} parent=1 // pred_fallthru
      _
    // Predicated region
    $region14: #{tpu_custom_call.1} parent=1 // pred_check
      _
    $region15: #{tpu_custom_call.1} parent=1 // pred_check_branch
      %39 = sbr.rel (0) target = $region17
    $region16: #{tpu_custom_call.1} parent=1 // pred_region
      %41 = dma.done [#allocation4], 1536
    $region17: #{tpu_custom_call.1} parent=1 // pred_fallthru
      _
    // Predicated region
    $region18: #{tpu_custom_call.1} parent=1 // pred_check
      _
    $region19: #{tpu_custom_call.1} parent=1 // pred_check_branch
      %43 = sbr.rel (0) target = $region21
    $region20: #{tpu_custom_call.1} parent=1 // pred_region
      %45 = dma.done [#allocation6], 96
    $region21: #{tpu_custom_call.1} parent=1 // pred_fallthru
      _
    %v46 = vld [vmem:[#allocation3] sm:$0xff]
    %v47 = vld [vmem:[#allocation3 + $0x8] sm:$0xff]
    %v48 = vld [vmem:[#allocation3 + $0x10] sm:$0xff]
    %v49 = vld [vmem:[#allocation3 + $0x18] sm:$0xff]
    %v50 = vld [vmem:[#allocation3 + $0x20] sm:$0xff]
    %v51 = vld [vmem:[#allocation3 + $0x28] sm:$0xff]
    %v52 = vld [vmem:[#allocation3 + $0x30] sm:$0xff]
    %v53 = vld [vmem:[#allocation3 + $0x38] sm:$0xff]
    %v54 = vld [vmem:[#allocation3 + $0x40] sm:$0xff]
    %v55 = vld [vmem:[#allocation3 + $0x48] sm:$0xff]
    %v56 = vld [vmem:[#allocation3 + $0x50] sm:$0xff]
    %v57 = vld [vmem:[#allocation3 + $0x58] sm:$0xff]
    %v58 = vld [vmem:[#allocation5] sm:$0x3f]
    %v60 = vperm.slane %v58, 0
    %v61 = vperm.slane %v58, 1
    %v62 = vperm.slane %v58, 2
    %v63 = vperm.slane %v58, 3
    %v64 = vperm.slane %v58, 4
    %v65 = vperm.slane %v58, 5
    %v72 = vmul.f32 %v46, %v60
    %v73 = vmul.f32 %v47, %v61
    %v74 = vmul.f32 %v48, %v62
    %v75 = vmul.f32 %v49, %v63
    %v76 = vmul.f32 %v50, %v64
    %v77 = vmul.f32 %v51, %v65
    %v78 = vmul.f32 %v52, %v60
    %v79 = vmul.f32 %v53, %v61
    %v80 = vmul.f32 %v54, %v62
    %v81 = vmul.f32 %v55, %v63
    %v82 = vmul.f32 %v56, %v64
    %v83 = vmul.f32 %v57, %v65
    %v84 = vadd.f32 %v72, %v73
    %v85 = vadd.f32 %v84, %v74
    %v86 = vadd.f32 %v85, %v75
    %v87 = vadd.f32 %v86, %v76
    %v88 = vadd.f32 %v87, %v77
    %89 = vadd.xlane.f32.xlu0 %v88
    %v90 = vpop.xlane.xlu0 %89
    %v91 = vadd.f32 %v78, %v79
    %v92 = vadd.f32 %v91, %v80
    %v93 = vadd.f32 %v92, %v81
    %v94 = vadd.f32 %v93, %v82
    %v95 = vadd.f32 %v94, %v83
    %96 = vadd.xlane.f32.xlu0 %v95
    %v97 = vpop.xlane.xlu0 %96
    %v98 = vld [vmem:[#allocation2] sm:$0x1]
    %v100 = vperm.slane %v98, 0
    %v102 = vadd.f32 %v90, %v100
    %v103 = vadd.f32 %v97, %v100
    %vm104 = vcmask 7168
    %105 = vst.msk [vmem:[%s3] sm:$0xff] %vm104, %v102
    %106 = vst.msk [vmem:[%s3 + $0x8] sm:$0xff] %vm104, %v103
    // Predicated region
    $region22: #{tpu_custom_call.1} parent=1 // pred_check
      _
    $region23: #{tpu_custom_call.1} parent=1 // pred_check_branch
      %108 = sbr.rel (0) target = $region25
    $region24: #{tpu_custom_call.1} parent=1 // pred_region
      _
    $region25: #{tpu_custom_call.1} parent=1 // pred_fallthru
      _
    // Predicated region
    $region26: #{tpu_custom_call.1} parent=1 // pred_check
      _
    $region27: #{tpu_custom_call.1} parent=1 // pred_check_branch
      %110 = sbr.rel (0) target = $region29
    $region28: #{tpu_custom_call.1} parent=1 // pred_region
      _
    $region29: #{tpu_custom_call.1} parent=1 // pred_fallthru
      _
    %111 = vsyncpa [#allocation4], 1
    %112 = vsyncpa [#allocation6], 1

</llo_original>
